<compile_context>
chip_gen: v7x
topology: tpu7x:2x2x1
jax: 0.10.0
libtpu: 0.0.40
codegen_flags: <defaults>
</compile_context>

<pallas_src>
import jax
import jax.numpy as jnp
from jax.experimental import pallas as pl
from jax.experimental.pallas import tpu as pltpu


def _make_deep_kernel(n_layers: int):
    """Fused kernel on transposed activations h^T = (features, batch_tile).

    Per hidden layer (BN affine folded into W'/b'):  h <- relu(W'^T @ h + b'^T)
    Final layer:                                     out <- w_f^T @ h + b_f   (1, tb), lane-dense
    Dropout at eval time is identity.
    """

    def kernel(*refs):
        if n_layers > 1:
            x_ref, w0_ref, wstack_ref, bstack_ref, wf_ref, bf_ref, o_ref = refs
        else:
            x_ref, w0_ref, bstack_ref, wf_ref, bf_ref, o_ref = refs
            wstack_ref = None

        h = x_ref[...]  # (D, tb) bf16, activations stay transposed throughout
        for layer in range(n_layers):
            # (d_out, d_in) bf16 weights, BN scale folded in; static layer index.
            w = w0_ref[...] if layer == 0 else wstack_ref[layer - 1]
            b = bstack_ref[layer]  # (d_out, 1) f32, BN shift folded in
            # MXU matmul in bf16 with f32 accumulation; f32 epilogue (bias + ReLU).
            y = jnp.dot(w, h, preferred_element_type=jnp.float32)
            y = jnp.maximum(y + b, 0.0)
            h = y.astype(jnp.bfloat16)

        # Final (d_out -> 1) projection, already in packed orientation: (1, d_out)@(d_out, tb).
        out = jnp.dot(wf_ref[...], h, preferred_element_type=jnp.float32) + bf_ref[...]
        o_ref[...] = out  # (1, tb) f32, full-lane-width unmasked store

    return kernel


def _pick_grid(batch: int):
    """1 grid step on single-TC chips (v5e/v6e); 2 CORE_PARALLEL steps on v7x."""
    kind = jax.devices()[0].device_kind.lower()
    multi_tc = ("v7" in kind) or ("7x" in kind)
    if multi_tc and hasattr(pltpu, "CORE_PARALLEL") and batch % 256 == 0:
        return 2, (pltpu.CORE_PARALLEL,)
    return 1, ("arbitrary",)


def deep_forward(x, layer_params, final_w, final_b, *, num_grid_steps=None):
    """Runs the fused Deep forward pass (eval mode).

    Args:
      x: (B, input_dim) float32 activations.
      layer_params: list of (W, b, bn_scale, bn_shift) tuples, one per hidden layer.
        W: (d_in, d_out); b, bn_scale, bn_shift: (1, d_out).
      final_w: (d_out, 1); final_b: (1, 1).

    Returns:
      (B, 1) float32.
    """
    B, D = x.shape
    n_layers = len(layer_params)
    d_out = final_w.shape[0]

    if num_grid_steps is None:
        num_grid_steps, semantics = _pick_grid(B)
    else:
        semantics = ("arbitrary",) if num_grid_steps == 1 else ("parallel",)
    if num_grid_steps > 1 and (B % num_grid_steps != 0 or (B // num_grid_steps) % 128 != 0):
        num_grid_steps, semantics = 1, ("arbitrary",)
    tb = B // num_grid_steps

    # Fold BN affine into the linear weights (trace-time algebra), transpose everything so
    # the kernel works on h^T, and quantize matmul operands to bf16 (f32 acc in-kernel).
    w_list, b_list = [], []
    flops = 0
    for (w, b, s, t) in layer_params:
        w_list.append((w * s).T.astype(jnp.bfloat16))                     # (d_out, d_in)
        b_list.append((b * s + t).reshape(-1, 1).astype(jnp.float32))     # (d_out, 1)
        flops += 2 * B * w.shape[0] * w.shape[1]
    flops += 2 * B * d_out  # final projection

    x_t = x.T.astype(jnp.bfloat16)            # (D, B) — layout plumbing in the wrapper
    w0_t = w_list[0]                          # (d_out, D)
    b_stack = jnp.stack(b_list)               # (n_layers, d_out, 1) f32
    wf_t = final_w.T.astype(jnp.bfloat16)     # (1, d_out)
    bf = final_b.astype(jnp.float32)          # (1, 1)

    operands = [x_t, w0_t]
    in_specs = [pl.BlockSpec((D, tb), lambda i: (0, i)),
                pl.BlockSpec(w0_t.shape, lambda i: (0, 0))]
    if n_layers > 1:
        w_stack = jnp.stack(w_list[1:])       # (n_layers-1, d_out, d_out) bf16
        operands.append(w_stack)
        in_specs.append(pl.BlockSpec(w_stack.shape, lambda i: (0, 0, 0)))
    operands.append(b_stack)
    in_specs.append(pl.BlockSpec(b_stack.shape, lambda i: (0, 0, 0)))
    operands += [wf_t, bf]
    in_specs += [pl.BlockSpec(wf_t.shape, lambda i: (0, 0)),
                 pl.BlockSpec(bf.shape, lambda i: (0, 0))]

    bytes_accessed = (sum(int(p.size) * p.dtype.itemsize for p in operands)
                      + B * 4)  # lane-dense (1, B) f32 output

    kernel = _make_deep_kernel(n_layers)
    out_row = pl.pallas_call(
        kernel,
        out_shape=jax.ShapeDtypeStruct((1, B), jnp.float32),
        grid_spec=pltpu.PrefetchScalarGridSpec(
            num_scalar_prefetch=0,
            grid=(num_grid_steps,),
            in_specs=in_specs,
            out_specs=pl.BlockSpec((1, tb), lambda i: (0, i)),
        ),
        compiler_params=pltpu.CompilerParams(dimension_semantics=semantics),
        cost_estimate=pl.CostEstimate(
            flops=int(flops), transcendentals=0,
            bytes_accessed=int(bytes_accessed)),
    )(*operands)

    # (1, B) -> (B, 1): row-major reshape of a flat vector, no data movement.
    return out_row.reshape(B, 1)


def init_deep_params(key, input_dim, output_dim, n_layers):
    """Deterministic parameter init mirroring the PyTorch module's shapes."""
    eps = 1e-5
    layer_params = []
    d_in = input_dim
    for _ in range(n_layers):
        key, kw, kb, kg, kbe, km, kv = jax.random.split(key, 7)
        bound = 1.0 / jnp.sqrt(d_in)
        w = jax.random.uniform(kw, (d_in, output_dim), jnp.float32, -bound, bound)
        b = jax.random.uniform(kb, (1, output_dim), jnp.float32, -bound, bound)
        gamma = jax.random.uniform(kg, (1, output_dim), jnp.float32, 0.5, 1.5)
        beta = jax.random.uniform(kbe, (1, output_dim), jnp.float32, -0.5, 0.5)
        running_mean = jax.random.uniform(km, (1, output_dim), jnp.float32, -0.5, 0.5)
        running_var = jax.random.uniform(kv, (1, output_dim), jnp.float32, 0.5, 1.5)
        # Fold BatchNorm1d (eval mode) into a per-feature affine.
        bn_scale = gamma / jnp.sqrt(running_var + eps)
        bn_shift = beta - running_mean * bn_scale
        layer_params.append((w, b, bn_scale, bn_shift))
        d_in = output_dim

    key, kfw, kfb = jax.random.split(key, 3)
    bound = 1.0 / jnp.sqrt(output_dim)
    final_w = jax.random.uniform(kfw, (output_dim, 1), jnp.float32, -bound, bound)
    final_b = jax.random.uniform(kfb, (1, 1), jnp.float32, -bound, bound)
    return layer_params, final_w, final_b


def deep_reference(x, layer_params, final_w, final_b):
    """Pure-JAX f32 reference of the same eval-mode forward pass."""
    h = x
    for (w, b, s, t) in layer_params:
        h = jnp.maximum((h @ w + b) * s + t, 0.0)
    return h @ final_w + final_b


if __name__ == "__main__":
    # Shapes consistent with the module:
    #   input_dim = len(field_dims) * embed_dim = 4 * 8 = 32, output_dim = 32, n_layers = 3.
    # batch = 512: one grid step on v5e/v6e, two 256-row CORE_PARALLEL steps on v7x.
    batch, input_dim, output_dim, n_layers = 512, 32, 32, 3

    key = jax.random.PRNGKey(0)
    key, kx = jax.random.split(key)
    x = jax.random.normal(kx, (batch, input_dim), jnp.float32)

    layer_params, final_w, final_b = init_deep_params(
        key, input_dim, output_dim, n_layers)

    out = deep_forward(x, layer_params, final_w, final_b)
    out = jax.block_until_ready(out)

    ref = deep_reference(x, layer_params, final_w, final_b)
    assert out.shape == (batch, 1)
    # Kernel uses bf16 matmul operands with f32 accumulation -> compare against the
    # f32 reference with a bf16-appropriate tolerance.
    assert jnp.allclose(out, ref, atol=5e-2, rtol=5e-2), (
        float(jnp.max(jnp.abs(out - ref))))

    print("KERNEL_OK")
</pallas_src>

<mosaic_0001>
module attributes {stable_mosaic.version = 11 : i64} {
  func.func @kernel(%arg0: i32, %arg1: memref<32x512xbf16, #tpu.memory_space<vmem>>, %arg2: memref<32x32xbf16, #tpu.memory_space<vmem>>, %arg3: memref<2x32x32xbf16, #tpu.memory_space<vmem>>, %arg4: memref<3x32x1xf32, #tpu.memory_space<vmem>>, %arg5: memref<1x32xbf16, #tpu.memory_space<vmem>>, %arg6: memref<1x1xf32, #tpu.memory_space<vmem>>, %arg7: memref<1x512xf32, #tpu.memory_space<vmem>>) attributes {dimension_semantics = [#tpu.dimension_semantics<arbitrary>], iteration_bounds = array<i64: 1>, scalar_prefetch = 0 : i64, scratch_operands = 0 : i64, tpu.core_type = #tpu.core_type<tc>, window_params = [{transform_indices = @transform_0, window_bounds = array<i64: 32, 512>}, {pipeline_mode = #tpu.pipeline_mode<synchronous>, transform_indices = @transform_1, window_bounds = array<i64: 32, 32>}, {pipeline_mode = #tpu.pipeline_mode<synchronous>, transform_indices = @transform_2, window_bounds = array<i64: 2, 32, 32>}, {pipeline_mode = #tpu.pipeline_mode<synchronous>, transform_indices = @transform_3, window_bounds = array<i64: 3, 32, 1>}, {pipeline_mode = #tpu.pipeline_mode<synchronous>, transform_indices = @transform_4, window_bounds = array<i64: 1, 32>}, {pipeline_mode = #tpu.pipeline_mode<synchronous>, transform_indices = @transform_5, window_bounds = array<i64: 1, 1>}, {transform_indices = @transform_6, window_bounds = array<i64: 1, 512>}]} {
    %c0 = arith.constant 0 : index
    %c0_0 = arith.constant 0 : index
    %0 = vector.load %arg1[%c0, %c0_0] : memref<32x512xbf16, #tpu.memory_space<vmem>>, vector<32x512xbf16>
    %c0_1 = arith.constant 0 : index
    %c0_2 = arith.constant 0 : index
    %1 = vector.load %arg2[%c0_1, %c0_2] : memref<32x32xbf16, #tpu.memory_space<vmem>>, vector<32x32xbf16>
    %c0_3 = arith.constant 0 : index
    %c0_4 = arith.constant 0 : index
    %c0_5 = arith.constant 0 : index
    %2 = vector.load %arg4[%c0_3, %c0_4, %c0_5] : memref<3x32x1xf32, #tpu.memory_space<vmem>>, vector<1x32x1xf32>
    %3 = vector.shape_cast %2 : vector<1x32x1xf32> to vector<32x1xf32>
    %cst = arith.constant dense<0.000000e+00> : vector<32x512xf32>
    %4 = tpu.matmul %1, %0, %cst {dimension_numbers = #tpu.dot_dimension_numbers<[1], [0], [0], [1], [0, 0, 1, 1], [], []>} : vector<32x32xbf16>, vector<32x512xbf16>, vector<32x512xf32> -> vector<32x512xf32>
    %5 = vector.broadcast %3 : vector<32x1xf32> to vector<32x512xf32>
    %6 = arith.addf %4, %5 : vector<32x512xf32>
    %cst_6 = arith.constant 0.000000e+00 : f32
    %7 = vector.broadcast %cst_6 : f32 to vector<32x512xf32>
    %8 = arith.maximumf %6, %7 : vector<32x512xf32>
    %9 = arith.truncf %8 : vector<32x512xf32> to vector<32x512xbf16>
    %c0_7 = arith.constant 0 : index
    %c0_8 = arith.constant 0 : index
    %c0_9 = arith.constant 0 : index
    %10 = vector.load %arg3[%c0_7, %c0_8, %c0_9] : memref<2x32x32xbf16, #tpu.memory_space<vmem>>, vector<1x32x32xbf16>
    %11 = vector.shape_cast %10 : vector<1x32x32xbf16> to vector<32x32xbf16>
    %c1 = arith.constant 1 : index
    %c0_10 = arith.constant 0 : index
    %c0_11 = arith.constant 0 : index
    %12 = vector.load %arg4[%c1, %c0_10, %c0_11] : memref<3x32x1xf32, #tpu.memory_space<vmem>>, vector<1x32x1xf32>
    %13 = vector.shape_cast %12 : vector<1x32x1xf32> to vector<32x1xf32>
    %cst_12 = arith.constant dense<0.000000e+00> : vector<32x512xf32>
    %14 = tpu.matmul %11, %9, %cst_12 {dimension_numbers = #tpu.dot_dimension_numbers<[1], [0], [0], [1], [0, 0, 1, 1], [], []>} : vector<32x32xbf16>, vector<32x512xbf16>, vector<32x512xf32> -> vector<32x512xf32>
    %15 = vector.broadcast %13 : vector<32x1xf32> to vector<32x512xf32>
    %16 = arith.addf %14, %15 : vector<32x512xf32>
    %cst_13 = arith.constant 0.000000e+00 : f32
    %17 = vector.broadcast %cst_13 : f32 to vector<32x512xf32>
    %18 = arith.maximumf %16, %17 : vector<32x512xf32>
    %19 = arith.truncf %18 : vector<32x512xf32> to vector<32x512xbf16>
    %c1_14 = arith.constant 1 : index
    %c0_15 = arith.constant 0 : index
    %c0_16 = arith.constant 0 : index
    %20 = vector.load %arg3[%c1_14, %c0_15, %c0_16] : memref<2x32x32xbf16, #tpu.memory_space<vmem>>, vector<1x32x32xbf16>
    %21 = vector.shape_cast %20 : vector<1x32x32xbf16> to vector<32x32xbf16>
    %c2 = arith.constant 2 : index
    %c0_17 = arith.constant 0 : index
    %c0_18 = arith.constant 0 : index
    %22 = vector.load %arg4[%c2, %c0_17, %c0_18] : memref<3x32x1xf32, #tpu.memory_space<vmem>>, vector<1x32x1xf32>
    %23 = vector.shape_cast %22 : vector<1x32x1xf32> to vector<32x1xf32>
    %cst_19 = arith.constant dense<0.000000e+00> : vector<32x512xf32>
    %24 = tpu.matmul %21, %19, %cst_19 {dimension_numbers = #tpu.dot_dimension_numbers<[1], [0], [0], [1], [0, 0, 1, 1], [], []>} : vector<32x32xbf16>, vector<32x512xbf16>, vector<32x512xf32> -> vector<32x512xf32>
    %25 = vector.broadcast %23 : vector<32x1xf32> to vector<32x512xf32>
    %26 = arith.addf %24, %25 : vector<32x512xf32>
    %cst_20 = arith.constant 0.000000e+00 : f32
    %27 = vector.broadcast %cst_20 : f32 to vector<32x512xf32>
    %28 = arith.maximumf %26, %27 : vector<32x512xf32>
    %29 = arith.truncf %28 : vector<32x512xf32> to vector<32x512xbf16>
    %c0_21 = arith.constant 0 : index
    %c0_22 = arith.constant 0 : index
    %30 = vector.load %arg5[%c0_21, %c0_22] : memref<1x32xbf16, #tpu.memory_space<vmem>>, vector<1x32xbf16>
    %cst_23 = arith.constant dense<0.000000e+00> : vector<1x512xf32>
    %31 = tpu.matmul %30, %29, %cst_23 {dimension_numbers = #tpu.dot_dimension_numbers<[1], [0], [0], [1], [0, 0, 1, 1], [], []>} : vector<1x32xbf16>, vector<32x512xbf16>, vector<1x512xf32> -> vector<1x512xf32>
    %c0_24 = arith.constant 0 : index
    %c0_25 = arith.constant 0 : index
    %32 = vector.load %arg6[%c0_24, %c0_25] : memref<1x1xf32, #tpu.memory_space<vmem>>, vector<1x1xf32>
    %33 = vector.broadcast %32 : vector<1x1xf32> to vector<1x512xf32>
    %34 = arith.addf %31, %33 : vector<1x512xf32>
    %c0_26 = arith.constant 0 : index
    %c0_27 = arith.constant 0 : index
    %35 = vector.load %arg7[%c0_26, %c0_27] : memref<1x512xf32, #tpu.memory_space<vmem>>, vector<1x512xf32>
    tpu.vector_store %arg7[%c0_26, %c0_27], %34 {strides = array<i32>} : memref<1x512xf32, #tpu.memory_space<vmem>>, vector<1x512xf32>,
    return
  }
  func.func @transform_0(%arg0: i32) -> (i32, i32) {
    %c0_i32 = arith.constant 0 : i32
    %c0_i32_0 = arith.constant 0 : i32
    return %c0_i32, %arg0 : i32, i32
  }
  func.func @transform_1(%arg0: i32) -> (i32, i32) {
    %c0_i32 = arith.constant 0 : i32
    %c0_i32_0 = arith.constant 0 : i32
    %c0_i32_1 = arith.constant 0 : i32
    return %c0_i32, %c0_i32_0 : i32, i32
  }
  func.func @transform_2(%arg0: i32) -> (i32, i32, i32) {
    %c0_i32 = arith.constant 0 : i32
    %c0_i32_0 = arith.constant 0 : i32
    %c0_i32_1 = arith.constant 0 : i32
    %c0_i32_2 = arith.constant 0 : i32
    return %c0_i32, %c0_i32_0, %c0_i32_1 : i32, i32, i32
  }
  func.func @transform_3(%arg0: i32) -> (i32, i32, i32) {
    %c0_i32 = arith.constant 0 : i32
    %c0_i32_0 = arith.constant 0 : i32
    %c0_i32_1 = arith.constant 0 : i32
    %c0_i32_2 = arith.constant 0 : i32
    return %c0_i32, %c0_i32_0, %c0_i32_1 : i32, i32, i32
  }
  func.func @transform_4(%arg0: i32) -> (i32, i32) {
    %c0_i32 = arith.constant 0 : i32
    %c0_i32_0 = arith.constant 0 : i32
    %c0_i32_1 = arith.constant 0 : i32
    return %c0_i32, %c0_i32_0 : i32, i32
  }
  func.func @transform_5(%arg0: i32) -> (i32, i32) {
    %c0_i32 = arith.constant 0 : i32
    %c0_i32_0 = arith.constant 0 : i32
    %c0_i32_1 = arith.constant 0 : i32
    return %c0_i32, %c0_i32_0 : i32, i32
  }
  func.func @transform_6(%arg0: i32) -> (i32, i32) {
    %c0_i32 = arith.constant 0 : i32
    %c0_i32_0 = arith.constant 0 : i32
    return %c0_i32, %arg0 : i32, i32
  }
}

</mosaic_0001>

<llo_original>
// kernel: tpu_custom_call.1
$region0: #{tpu_custom_call.1}
  #allocation0 [shape = 'u32[]', space=smem, size = 0x4, offset = 0x4, fixed_abs, tag = 'smem constant byte address 0x4 - core index']
  #allocation1 [shape = 'u32[144,128]{1,0:T(1,128)}', space=vmem, size = 0x12000, scoped, tag = 'internal scratch']
  #allocation2 [shape = 'f32[1,1]{1,0:T(1,128)S(1)}', space=vmem, size = 0x200, scoped, tag = 'scoped memory for tpu_custom_call.1']
  %s0 = inlined_call_operand.vmem [shape: bf16[32,512], index: 0, kind: input, shape index: {}]
  %s1 = inlined_call_operand.hbm [shape: bf16[32,32], index: 1, kind: input, shape index: {}]
  %s2 = inlined_call_operand.vmem [shape: bf16[2,32,32], index: 2, kind: input, shape index: {}]
  %s3 = inlined_call_operand.vmem [shape: f32[3,32,1], index: 3, kind: input, shape index: {}]
  %s4 = inlined_call_operand.vmem [shape: bf16[1,32], index: 4, kind: input, shape index: {}]
  %s5 = inlined_call_operand.<no memory space> [shape: f32[1,1], index: 5, kind: input, shape index: {}]
  %s6 = inlined_call_operand.hbm [shape: f32[1,512], index: 6, kind: output, shape index: {}]
  %s7 = sld [smem:[#allocation0]]
  $region38: #{tpu_custom_call.1} parent=0
    _
  %s9 = ssub.s32 1, %s7
  %s10 = scalar_select 0, %s9, %s7
  %v11 = vstv %s5
  %12 = vst [vmem:[#allocation2] sm:$0x1] %v11
  $region1: #{tpu_custom_call.1} parent=0
    #allocation3 [shape = 'u8[8192]{0}', space=vmem, size = 0x2000, scoped, tag = 'input window, operand 1, single buffered']
    #allocation4 [shape = 's32[1]{0}', space=sflag, size = 0x4, scoped, tag = 'scoped memory for tpu_custom_call.1']
    #allocation5 [shape = 's32[1]{0}', space=sflag, size = 0x4, scoped, tag = 'scoped memory for tpu_custom_call.1']
    #allocation6 [shape = 'u8[2048]{0}', space=vmem, size = 0x800, scoped, tag = 'output window, operand 0, single buffered']
    %13 = vsyncpa [#allocation4], 0
    %14 = vsyncpa [#allocation5], 0
    // Predicated region
    $region2: #{tpu_custom_call.1} parent=1 // pred_check
      _
    $region3: #{tpu_custom_call.1} parent=1 // pred_check_branch
      %16 = sbr.rel (0) target = $region5
    $region4: #{tpu_custom_call.1} parent=1 // pred_region
      _
    $region5: #{tpu_custom_call.1} parent=1 // pred_fallthru
      _
    // Predicated region
    $region6: #{tpu_custom_call.1} parent=1 // pred_check
      _
    $region7: #{tpu_custom_call.1} parent=1 // pred_check_branch
      %18 = sbr.rel (0) target = $region9
    $region8: #{tpu_custom_call.1} parent=1 // pred_region
      %s20 = ssub.s32 256, 256
      %21 = vsyncadd [#allocation4], %s20
      %s22 = sshll.u32 [#allocation3], 4
      %s23 = int_to_ptr.vmem [resolvable:$true] %s22
      %28 = dma.hbm_to_vmem [thread:$0]  %s1, 256, %s23, [#allocation4], 64, 64, 4
    $region9: #{tpu_custom_call.1} parent=1 // pred_fallthru
      _
    // Predicated region
    $region10: #{tpu_custom_call.1} parent=1 // pred_check
      _
    $region11: #{tpu_custom_call.1} parent=1 // pred_check_branch
      %30 = sbr.rel (0) target = $region13
    $region12: #{tpu_custom_call.1} parent=1 // pred_region
      _
    $region13: #{tpu_custom_call.1} parent=1 // pred_fallthru
      _
    // Predicated region
    $region14: #{tpu_custom_call.1} parent=1 // pred_check
      _
    $region15: #{tpu_custom_call.1} parent=1 // pred_check_branch
      %32 = sbr.rel (0) target = $region17
    $region16: #{tpu_custom_call.1} parent=1 // pred_region
      _
    $region17: #{tpu_custom_call.1} parent=1 // pred_fallthru
      _
    // Predicated region
    $region18: #{tpu_custom_call.1} parent=1 // pred_check
      _
    $region19: #{tpu_custom_call.1} parent=1 // pred_check_branch
      %34 = sbr.rel (0) target = $region21
    $region20: #{tpu_custom_call.1} parent=1 // pred_region
      _
    $region21: #{tpu_custom_call.1} parent=1 // pred_fallthru
      _
    // Predicated region
    $region22: #{tpu_custom_call.1} parent=1 // pred_check
      _
    $region23: #{tpu_custom_call.1} parent=1 // pred_check_branch
      %36 = sbr.rel (0) target = $region25
    $region24: #{tpu_custom_call.1} parent=1 // pred_region
      _
    $region25: #{tpu_custom_call.1} parent=1 // pred_fallthru
      _
    // Predicated region
    $region26: #{tpu_custom_call.1} parent=1 // pred_check
      _
    $region27: #{tpu_custom_call.1} parent=1 // pred_check_branch
      %38 = sbr.rel (0) target = $region29
    $region28: #{tpu_custom_call.1} parent=1 // pred_region
      %39 = dma.done [#allocation4], 256
    $region29: #{tpu_custom_call.1} parent=1 // pred_fallthru
      _
    %v41 = vld [vmem:[%s0] sm:$0xff]
    %v42 = vld [vmem:[%s0 + $0x8] sm:$0xff]
    %v43 = vld [vmem:[%s0 + $0x10] sm:$0xff]
    %v44 = vld [vmem:[%s0 + $0x18] sm:$0xff]
    %v45 = vld [vmem:[%s0 + $0x20] sm:$0xff]
    %v46 = vld [vmem:[%s0 + $0x28] sm:$0xff]
    %v47 = vld [vmem:[%s0 + $0x30] sm:$0xff]
    %v48 = vld [vmem:[%s0 + $0x38] sm:$0xff]
    %v49 = vld [vmem:[#allocation3] sm:$0xf]
    %v50 = vld [vmem:[#allocation3 + $0x4] sm:$0xf]
    %v51 = vld [vmem:[#allocation3 + $0x8] sm:$0xf]
    %v52 = vld [vmem:[#allocation3 + $0xc] sm:$0xf]
    %v53 = vld [vmem:[%s3] sm:$0xff]
    %v54 = vld [vmem:[%s3 + $0x8] sm:$0xff]
    %v55 = vld [vmem:[%s3 + $0x10] sm:$0xff]
    %v56 = vld [vmem:[%s3 + $0x18] sm:$0xff]
    %58 = vset.pattern.permute.xlu0 0
    %59 = vperm.xlu0 %58, %v53
    %v60 = vpop.permute.xlu0 %59
    %63 = vset.pattern.permute.xlu0 0
    %64 = vperm.xlu0 %63, %v54
    %v65 = vpop.permute.xlu0 %64
    %68 = vset.pattern.permute.xlu0 0
    %69 = vperm.xlu0 %68, %v55
    %v70 = vpop.permute.xlu0 %69
    %73 = vset.pattern.permute.xlu0 0
    %74 = vperm.xlu0 %73, %v56
    %v75 = vpop.permute.xlu0 %74
    %v81 = vunpack.c.l.b16 %v49
    %v82 = vunpack.c.l.b16 %v50
    %v83 = vunpack.c.l.b16 %v51
    %v84 = vunpack.c.l.b16 %v52
    %v85 = vpack.c.b16 %v82, %v81
    %v86 = vpack.c.b16 %v84, %v83
    %v95 = vunpack.c.l.b16 %v41
    %v96 = vunpack.c.h.b16 %v41
    %v97 = vunpack.c.l.b16 %v42
    %v98 = vunpack.c.h.b16 %v42
    %v99 = vunpack.c.l.b16 %v43
    %v100 = vunpack.c.h.b16 %v43
    %v101 = vunpack.c.l.b16 %v44
    %v102 = vunpack.c.h.b16 %v44
    %v103 = vunpack.c.l.b16 %v45
    %v104 = vunpack.c.h.b16 %v45
    %v105 = vunpack.c.l.b16 %v46
    %v106 = vunpack.c.h.b16 %v46
    %v107 = vunpack.c.l.b16 %v47
    %v108 = vunpack.c.h.b16 %v47
    %v109 = vunpack.c.l.b16 %v48
    %v110 = vunpack.c.h.b16 %v48
    %v111 = vpack.c.b16 %v99, %v95
    %v112 = vpack.c.b16 %v100, %v96
    %v113 = vpack.c.b16 %v101, %v97
    %v114 = vpack.c.b16 %v102, %v98
    %v115 = vpack.c.b16 %v107, %v103
    %v116 = vpack.c.b16 %v108, %v104
    %v117 = vpack.c.b16 %v109, %v105
    %v118 = vpack.c.b16 %v110, %v106
    %vm127 = vcmask 261120
    %v129 = vsel %vm127, %v85, 0
    %v132 = vsel %vm127, %v86, 0
    %134 = vmatprep.subr.bf16.mxu0 %v112
    %135 = vmatpush1.bf16.msra.mxu0 %v111
    %136 = vmatprep.subr.bf16.mxu0 %v116
    %137 = vmatpush1.bf16.msra.mxu0 %v115
    %138 = vmatprep.subr.bf16.mxu0 0
    %139 = vmatpush1.bf16.msra.mxu0 0
    %140 = vmatprep.subr.bf16.mxu0 0
    %141 = vmatpush1.bf16.msra.mxu0 0
    %142 = vmatprep.subr.bf16.mxu0 0
    %143 = vmatpush1.bf16.msra.mxu0 0
    %144 = vmatprep.subr.bf16.mxu0 0
    %145 = vmatpush1.bf16.msra.mxu0 0
    %146 = vmatprep.subr.bf16.mxu0 0
    %147 = vmatpush1.bf16.msra.mxu0 0
    %148 = vmatprep.subr.bf16.mxu0 0
    %149 = vmatpush1.bf16.msra.mxu0 0
    %150 = vmatprep.subr.bf16.mxu0 0
    %151 = vmatpush1.bf16.msra.mxu0 0
    %152 = vmatprep.subr.bf16.mxu0 0
    %153 = vmatpush1.bf16.msra.mxu0 0
    %154 = vmatprep.subr.bf16.mxu0 0
    %155 = vmatpush1.bf16.msra.mxu0 0
    %156 = vmatprep.subr.bf16.mxu0 0
    %157 = vmatpush1.bf16.msra.mxu0 0
    %158 = vmatprep.subr.bf16.mxu0 0
    %159 = vmatpush1.bf16.msra.mxu0 0
    %160 = vmatprep.subr.bf16.mxu0 0
    %161 = vmatpush1.bf16.msra.mxu0 0
    %162 = vmatprep.subr.bf16.mxu0 0
    %163 = vmatpush1.bf16.msra.mxu0 0
    %164 = vmatprep.subr.bf16.mxu0 0
    %165 = vmatpush1.bf16.msra.mxu0 0
    %166 = vmatprep.mubr.bf16.mxu0 0
    %167 = vmatmul.mubr.bf16.gmra.mrb[0].mxu0 %v129
    %v168 = vpop.f32.mrb[0].mxu0
    %v169 = vadd.f32 %v60, %v168
    %v170 = vpop.f32.mrb[0].mxu0
    %v171 = vadd.f32 %v60, %v170
    %v172 = vpop.f32.mrb[0].mxu0
    %v173 = vadd.f32 %v65, %v172
    %v174 = vpop.f32.mrb[0].mxu0
    %v175 = vadd.f32 %v65, %v174
    %176 = vmatprep.mubr.bf16.mxu0 0
    %177 = vmatmul.mubr.bf16.gmra.mrb[0].mxu0 %v132
    %v178 = vpop.f32.mrb[0].mxu0
    %v179 = vadd.f32 %v70, %v178
    %v180 = vpop.f32.mrb[0].mxu0
    %v181 = vadd.f32 %v70, %v180
    %v182 = vpop.f32.mrb[0].mxu0
    %v183 = vadd.f32 %v75, %v182
    %v184 = vpop.f32.mrb[0].mxu0
    %v185 = vadd.f32 %v75, %v184
    %186 = vdwg.mxu0
    %187 = vmatprep.subr.bf16.mxu0 %v114
    %188 = vmatpush1.bf16.msra.mxu0 %v113
    %189 = vmatprep.subr.bf16.mxu0 %v118
    %190 = vmatpush1.bf16.msra.mxu0 %v117
    %191 = vmatprep.subr.bf16.mxu0 0
    %192 = vmatpush1.bf16.msra.mxu0 0
    %193 = vmatprep.subr.bf16.mxu0 0
    %194 = vmatpush1.bf16.msra.mxu0 0
    %195 = vmatprep.subr.bf16.mxu0 0
    %196 = vmatpush1.bf16.msra.mxu0 0
    %197 = vmatprep.subr.bf16.mxu0 0
    %198 = vmatpush1.bf16.msra.mxu0 0
    %199 = vmatprep.subr.bf16.mxu0 0
    %200 = vmatpush1.bf16.msra.mxu0 0
    %201 = vmatprep.subr.bf16.mxu0 0
    %202 = vmatpush1.bf16.msra.mxu0 0
    %203 = vmatprep.subr.bf16.mxu0 0
    %204 = vmatpush1.bf16.msra.mxu0 0
    %205 = vmatprep.subr.bf16.mxu0 0
    %206 = vmatpush1.bf16.msra.mxu0 0
    %207 = vmatprep.subr.bf16.mxu0 0
    %208 = vmatpush1.bf16.msra.mxu0 0
    %209 = vmatprep.subr.bf16.mxu0 0
    %210 = vmatpush1.bf16.msra.mxu0 0
    %211 = vmatprep.subr.bf16.mxu0 0
    %212 = vmatpush1.bf16.msra.mxu0 0
    %213 = vmatprep.subr.bf16.mxu0 0
    %214 = vmatpush1.bf16.msra.mxu0 0
    %215 = vmatprep.subr.bf16.mxu0 0
    %216 = vmatpush1.bf16.msra.mxu0 0
    %217 = vmatprep.subr.bf16.mxu0 0
    %218 = vmatpush1.bf16.msra.mxu0 0
    %219 = vmatprep.mubr.bf16.mxu0 0
    %220 = vmatmul.mubr.bf16.gmra.mrb[0].mxu0 %v129
    %v221 = vpop.f32.mrb[0].mxu0
    %v222 = vadd.f32 %v60, %v221
    %v223 = vpop.f32.mrb[0].mxu0
    %v224 = vadd.f32 %v60, %v223
    %v225 = vpop.f32.mrb[0].mxu0
    %v226 = vadd.f32 %v65, %v225
    %v227 = vpop.f32.mrb[0].mxu0
    %v228 = vadd.f32 %v65, %v227
    %229 = vmatprep.mubr.bf16.mxu0 0
    %230 = vmatmul.mubr.bf16.gmra.mrb[0].mxu0 %v132
    %v231 = vpop.f32.mrb[0].mxu0
    %v232 = vadd.f32 %v70, %v231
    %v233 = vpop.f32.mrb[0].mxu0
    %v234 = vadd.f32 %v70, %v233
    %v235 = vpop.f32.mrb[0].mxu0
    %v236 = vadd.f32 %v75, %v235
    %v237 = vpop.f32.mrb[0].mxu0
    %v238 = vadd.f32 %v75, %v237
    %239 = vdwg.mxu0
    %v240 = vmax.f32 %v169, 0.0
    %v241 = vmax.f32 %v171, 0.0
    %v242 = vmax.f32 %v222, 0.0
    %v243 = vmax.f32 %v224, 0.0
    %v244 = vmax.f32 %v173, 0.0
    %v245 = vmax.f32 %v175, 0.0
    %v246 = vmax.f32 %v226, 0.0
    %v247 = vmax.f32 %v228, 0.0
    %v248 = vmax.f32 %v179, 0.0
    %v249 = vmax.f32 %v181, 0.0
    %v250 = vmax.f32 %v232, 0.0
    %v251 = vmax.f32 %v234, 0.0
    %v252 = vmax.f32 %v183, 0.0
    %v253 = vmax.f32 %v185, 0.0
    %v254 = vmax.f32 %v236, 0.0
    %v255 = vmax.f32 %v238, 0.0
    %v256 = vpack.c.bf16 %v244, %v240
    %v257 = vpack.c.bf16 %v245, %v241
    %v258 = vpack.c.bf16 %v246, %v242
    %v259 = vpack.c.bf16 %v247, %v243
    %v260 = vpack.c.bf16 %v252, %v248
    %v261 = vpack.c.bf16 %v253, %v249
    %v262 = vpack.c.bf16 %v254, %v250
    %v263 = vpack.c.bf16 %v255, %v251
    %v264 = vld [vmem:[%s2] sm:$0xf]
    %v265 = vld [vmem:[%s2 + $0x4] sm:$0xf]
    %v266 = vld [vmem:[%s2 + $0x8] sm:$0xf]
    %v267 = vld [vmem:[%s2 + $0xc] sm:$0xf]
    %s268 = scalar_lea.vmem %s3, 32
    %v269 = vld [vmem:[%s268] sm:$0xff]
    %v270 = vld [vmem:[%s268 + $0x8] sm:$0xff]
    %v271 = vld [vmem:[%s268 + $0x10] sm:$0xff]
    %v272 = vld [vmem:[%s268 + $0x18] sm:$0xff]
    %274 = vset.pattern.permute.xlu0 0
    %275 = vperm.xlu0 %274, %v269
    %v276 = vpop.permute.xlu0 %275
    %279 = vset.pattern.permute.xlu0 0
    %280 = vperm.xlu0 %279, %v270
    %v281 = vpop.permute.xlu0 %280
    %284 = vset.pattern.permute.xlu0 0
    %285 = vperm.xlu0 %284, %v271
    %v286 = vpop.permute.xlu0 %285
    %289 = vset.pattern.permute.xlu0 0
    %290 = vperm.xlu0 %289, %v272
    %v291 = vpop.permute.xlu0 %290
    %v297 = vunpack.c.l.b16 %v264
    %v298 = vunpack.c.l.b16 %v265
    %v299 = vunpack.c.l.b16 %v266
    %v300 = vunpack.c.l.b16 %v267
    %v301 = vpack.c.b16 %v298, %v297
    %v302 = vpack.c.b16 %v300, %v299
    %v304 = vsel %vm127, %v301, 0
    %v307 = vsel %vm127, %v302, 0
    %309 = vmatprep.subr.bf16.mxu0 %v257
    %310 = vmatpush1.bf16.msra.mxu0 %v256
    %311 = vmatprep.subr.bf16.mxu0 %v261
    %312 = vmatpush1.bf16.msra.mxu0 %v260
    %313 = vmatprep.subr.bf16.mxu0 0
    %314 = vmatpush1.bf16.msra.mxu0 0
    %315 = vmatprep.subr.bf16.mxu0 0
    %316 = vmatpush1.bf16.msra.mxu0 0
    %317 = vmatprep.subr.bf16.mxu0 0
    %318 = vmatpush1.bf16.msra.mxu0 0
    %319 = vmatprep.subr.bf16.mxu0 0
    %320 = vmatpush1.bf16.msra.mxu0 0
    %321 = vmatprep.subr.bf16.mxu0 0
    %322 = vmatpush1.bf16.msra.mxu0 0
    %323 = vmatprep.subr.bf16.mxu0 0
    %324 = vmatpush1.bf16.msra.mxu0 0
    %325 = vmatprep.subr.bf16.mxu0 0
    %326 = vmatpush1.bf16.msra.mxu0 0
    %327 = vmatprep.subr.bf16.mxu0 0
    %328 = vmatpush1.bf16.msra.mxu0 0
    %329 = vmatprep.subr.bf16.mxu0 0
    %330 = vmatpush1.bf16.msra.mxu0 0
    %331 = vmatprep.subr.bf16.mxu0 0
    %332 = vmatpush1.bf16.msra.mxu0 0
    %333 = vmatprep.subr.bf16.mxu0 0
    %334 = vmatpush1.bf16.msra.mxu0 0
    %335 = vmatprep.subr.bf16.mxu0 0
    %336 = vmatpush1.bf16.msra.mxu0 0
    %337 = vmatprep.subr.bf16.mxu0 0
    %338 = vmatpush1.bf16.msra.mxu0 0
    %339 = vmatprep.subr.bf16.mxu0 0
    %340 = vmatpush1.bf16.msra.mxu0 0
    %341 = vmatprep.mubr.bf16.mxu0 0
    %342 = vmatmul.mubr.bf16.gmra.mrb[0].mxu0 %v304
    %v343 = vpop.f32.mrb[0].mxu0
    %v344 = vadd.f32 %v276, %v343
    %v345 = vpop.f32.mrb[0].mxu0
    %v346 = vadd.f32 %v276, %v345
    %v347 = vpop.f32.mrb[0].mxu0
    %v348 = vadd.f32 %v281, %v347
    %v349 = vpop.f32.mrb[0].mxu0
    %v350 = vadd.f32 %v281, %v349
    %351 = vmatprep.mubr.bf16.mxu0 0
    %352 = vmatmul.mubr.bf16.gmra.mrb[0].mxu0 %v307
    %v353 = vpop.f32.mrb[0].mxu0
    %v354 = vadd.f32 %v286, %v353
    %v355 = vpop.f32.mrb[0].mxu0
    %v356 = vadd.f32 %v286, %v355
    %v357 = vpop.f32.mrb[0].mxu0
    %v358 = vadd.f32 %v291, %v357
    %v359 = vpop.f32.mrb[0].mxu0
    %v360 = vadd.f32 %v291, %v359
    %361 = vdwg.mxu0
    %362 = vmatprep.subr.bf16.mxu0 %v259
    %363 = vmatpush1.bf16.msra.mxu0 %v258
    %364 = vmatprep.subr.bf16.mxu0 %v263
    %365 = vmatpush1.bf16.msra.mxu0 %v262
    %366 = vmatprep.subr.bf16.mxu0 0
    %367 = vmatpush1.bf16.msra.mxu0 0
    %368 = vmatprep.subr.bf16.mxu0 0
    %369 = vmatpush1.bf16.msra.mxu0 0
    %370 = vmatprep.subr.bf16.mxu0 0
    %371 = vmatpush1.bf16.msra.mxu0 0
    %372 = vmatprep.subr.bf16.mxu0 0
    %373 = vmatpush1.bf16.msra.mxu0 0
    %374 = vmatprep.subr.bf16.mxu0 0
    %375 = vmatpush1.bf16.msra.mxu0 0
    %376 = vmatprep.subr.bf16.mxu0 0
    %377 = vmatpush1.bf16.msra.mxu0 0
    %378 = vmatprep.subr.bf16.mxu0 0
    %379 = vmatpush1.bf16.msra.mxu0 0
    %380 = vmatprep.subr.bf16.mxu0 0
    %381 = vmatpush1.bf16.msra.mxu0 0
    %382 = vmatprep.subr.bf16.mxu0 0
    %383 = vmatpush1.bf16.msra.mxu0 0
    %384 = vmatprep.subr.bf16.mxu0 0
    %385 = vmatpush1.bf16.msra.mxu0 0
    %386 = vmatprep.subr.bf16.mxu0 0
    %387 = vmatpush1.bf16.msra.mxu0 0
    %388 = vmatprep.subr.bf16.mxu0 0
    %389 = vmatpush1.bf16.msra.mxu0 0
    %390 = vmatprep.subr.bf16.mxu0 0
    %391 = vmatpush1.bf16.msra.mxu0 0
    %392 = vmatprep.subr.bf16.mxu0 0
    %393 = vmatpush1.bf16.msra.mxu0 0
    %394 = vmatprep.mubr.bf16.mxu0 0
    %395 = vmatmul.mubr.bf16.gmra.mrb[0].mxu0 %v304
    %v396 = vpop.f32.mrb[0].mxu0
    %v397 = vadd.f32 %v276, %v396
    %v398 = vpop.f32.mrb[0].mxu0
    %v399 = vadd.f32 %v276, %v398
    %v400 = vpop.f32.mrb[0].mxu0
    %v401 = vadd.f32 %v281, %v400
    %v402 = vpop.f32.mrb[0].mxu0
    %v403 = vadd.f32 %v281, %v402
    %404 = vmatprep.mubr.bf16.mxu0 0
    %405 = vmatmul.mubr.bf16.gmra.mrb[0].mxu0 %v307
    %v406 = vpop.f32.mrb[0].mxu0
    %v407 = vadd.f32 %v286, %v406
    %v408 = vpop.f32.mrb[0].mxu0
    %v409 = vadd.f32 %v286, %v408
    %v410 = vpop.f32.mrb[0].mxu0
    %v411 = vadd.f32 %v291, %v410
    %v412 = vpop.f32.mrb[0].mxu0
    %v413 = vadd.f32 %v291, %v412
    %414 = vdwg.mxu0
    %v415 = vmax.f32 %v344, 0.0
    %v416 = vmax.f32 %v346, 0.0
    %v417 = vmax.f32 %v397, 0.0
    %v418 = vmax.f32 %v399, 0.0
    %v419 = vmax.f32 %v348, 0.0
    %v420 = vmax.f32 %v350, 0.0
    %v421 = vmax.f32 %v401, 0.0
    %v422 = vmax.f32 %v403, 0.0
    %v423 = vmax.f32 %v354, 0.0
    %v424 = vmax.f32 %v356, 0.0
    %v425 = vmax.f32 %v407, 0.0
    %v426 = vmax.f32 %v409, 0.0
    %v427 = vmax.f32 %v358, 0.0
    %v428 = vmax.f32 %v360, 0.0
    %v429 = vmax.f32 %v411, 0.0
    %v430 = vmax.f32 %v413, 0.0
    %v431 = vpack.c.bf16 %v419, %v415
    %v432 = vpack.c.bf16 %v420, %v416
    %v433 = vpack.c.bf16 %v421, %v417
    %v434 = vpack.c.bf16 %v422, %v418
    %v435 = vpack.c.bf16 %v427, %v423
    %v436 = vpack.c.bf16 %v428, %v424
    %v437 = vpack.c.bf16 %v429, %v425
    %v438 = vpack.c.bf16 %v430, %v426
    %s439 = scalar_lea.vmem %s2, 16
    %v440 = vld [vmem:[%s439] sm:$0xf]
    %v441 = vld [vmem:[%s439 + $0x4] sm:$0xf]
    %v442 = vld [vmem:[%s439 + $0x8] sm:$0xf]
    %v443 = vld [vmem:[%s439 + $0xc] sm:$0xf]
    %s444 = scalar_lea.vmem %s3, 64
    %v445 = vld [vmem:[%s444] sm:$0xff]
    %v446 = vld [vmem:[%s444 + $0x8] sm:$0xff]
    %v447 = vld [vmem:[%s444 + $0x10] sm:$0xff]
    %v448 = vld [vmem:[%s444 + $0x18] sm:$0xff]
    %450 = vset.pattern.permute.xlu0 0
    %451 = vperm.xlu0 %450, %v445
    %v452 = vpop.permute.xlu0 %451
    %455 = vset.pattern.permute.xlu0 0
    %456 = vperm.xlu0 %455, %v446
    %v457 = vpop.permute.xlu0 %456
    %460 = vset.pattern.permute.xlu0 0
    %461 = vperm.xlu0 %460, %v447
    %v462 = vpop.permute.xlu0 %461
    %465 = vset.pattern.permute.xlu0 0
    %466 = vperm.xlu0 %465, %v448
    %v467 = vpop.permute.xlu0 %466
    %v473 = vunpack.c.l.b16 %v440
    %v474 = vunpack.c.l.b16 %v441
    %v475 = vunpack.c.l.b16 %v442
    %v476 = vunpack.c.l.b16 %v443
    %v477 = vpack.c.b16 %v474, %v473
    %v478 = vpack.c.b16 %v476, %v475
    %v480 = vsel %vm127, %v477, 0
    %v483 = vsel %vm127, %v478, 0
    %485 = vmatprep.subr.bf16.mxu0 %v432
    %486 = vmatpush1.bf16.msra.mxu0 %v431
    %487 = vmatprep.subr.bf16.mxu0 %v436
    %488 = vmatpush1.bf16.msra.mxu0 %v435
    %489 = vmatprep.subr.bf16.mxu0 0
    %490 = vmatpush1.bf16.msra.mxu0 0
    %491 = vmatprep.subr.bf16.mxu0 0
    %492 = vmatpush1.bf16.msra.mxu0 0
    %493 = vmatprep.subr.bf16.mxu0 0
    %494 = vmatpush1.bf16.msra.mxu0 0
    %495 = vmatprep.subr.bf16.mxu0 0
    %496 = vmatpush1.bf16.msra.mxu0 0
    %497 = vmatprep.subr.bf16.mxu0 0
    %498 = vmatpush1.bf16.msra.mxu0 0
    %499 = vmatprep.subr.bf16.mxu0 0
    %500 = vmatpush1.bf16.msra.mxu0 0
    %501 = vmatprep.subr.bf16.mxu0 0
    %502 = vmatpush1.bf16.msra.mxu0 0
    %503 = vmatprep.subr.bf16.mxu0 0
    %504 = vmatpush1.bf16.msra.mxu0 0
    %505 = vmatprep.subr.bf16.mxu0 0
    %506 = vmatpush1.bf16.msra.mxu0 0
    %507 = vmatprep.subr.bf16.mxu0 0
    %508 = vmatpush1.bf16.msra.mxu0 0
    %509 = vmatprep.subr.bf16.mxu0 0
    %510 = vmatpush1.bf16.msra.mxu0 0
    %511 = vmatprep.subr.bf16.mxu0 0
    %512 = vmatpush1.bf16.msra.mxu0 0
    %513 = vmatprep.subr.bf16.mxu0 0
    %514 = vmatpush1.bf16.msra.mxu0 0
    %515 = vmatprep.subr.bf16.mxu0 0
    %516 = vmatpush1.bf16.msra.mxu0 0
    %517 = vmatprep.mubr.bf16.mxu0 0
    %518 = vmatmul.mubr.bf16.gmra.mrb[0].mxu0 %v480
    %v519 = vpop.f32.mrb[0].mxu0
    %v520 = vadd.f32 %v452, %v519
    %v521 = vpop.f32.mrb[0].mxu0
    %v522 = vadd.f32 %v452, %v521
    %v523 = vpop.f32.mrb[0].mxu0
    %v524 = vadd.f32 %v457, %v523
    %v525 = vpop.f32.mrb[0].mxu0
    %v526 = vadd.f32 %v457, %v525
    %527 = vmatprep.mubr.bf16.mxu0 0
    %528 = vmatmul.mubr.bf16.gmra.mrb[0].mxu0 %v483
    %v529 = vpop.f32.mrb[0].mxu0
    %v530 = vadd.f32 %v462, %v529
    %v531 = vpop.f32.mrb[0].mxu0
    %v532 = vadd.f32 %v462, %v531
    %v533 = vpop.f32.mrb[0].mxu0
    %v534 = vadd.f32 %v467, %v533
    %v535 = vpop.f32.mrb[0].mxu0
    %v536 = vadd.f32 %v467, %v535
    %537 = vdwg.mxu0
    %538 = vmatprep.subr.bf16.mxu0 %v434
    %539 = vmatpush1.bf16.msra.mxu0 %v433
    %540 = vmatprep.subr.bf16.mxu0 %v438
    %541 = vmatpush1.bf16.msra.mxu0 %v437
    %542 = vmatprep.subr.bf16.mxu0 0
    %543 = vmatpush1.bf16.msra.mxu0 0
    %544 = vmatprep.subr.bf16.mxu0 0
    %545 = vmatpush1.bf16.msra.mxu0 0
    %546 = vmatprep.subr.bf16.mxu0 0
    %547 = vmatpush1.bf16.msra.mxu0 0
    %548 = vmatprep.subr.bf16.mxu0 0
    %549 = vmatpush1.bf16.msra.mxu0 0
    %550 = vmatprep.subr.bf16.mxu0 0
    %551 = vmatpush1.bf16.msra.mxu0 0
    %552 = vmatprep.subr.bf16.mxu0 0
    %553 = vmatpush1.bf16.msra.mxu0 0
    %554 = vmatprep.subr.bf16.mxu0 0
    %555 = vmatpush1.bf16.msra.mxu0 0
    %556 = vmatprep.subr.bf16.mxu0 0
    %557 = vmatpush1.bf16.msra.mxu0 0
    %558 = vmatprep.subr.bf16.mxu0 0
    %559 = vmatpush1.bf16.msra.mxu0 0
    %560 = vmatprep.subr.bf16.mxu0 0
    %561 = vmatpush1.bf16.msra.mxu0 0
    %562 = vmatprep.subr.bf16.mxu0 0
    %563 = vmatpush1.bf16.msra.mxu0 0
    %564 = vmatprep.subr.bf16.mxu0 0
    %565 = vmatpush1.bf16.msra.mxu0 0
    %566 = vmatprep.subr.bf16.mxu0 0
    %567 = vmatpush1.bf16.msra.mxu0 0
    %568 = vmatprep.subr.bf16.mxu0 0
    %569 = vmatpush1.bf16.msra.mxu0 0
    %570 = vmatprep.mubr.bf16.mxu0 0
    %571 = vmatmul.mubr.bf16.gmra.mrb[0].mxu0 %v480
    %v572 = vpop.f32.mrb[0].mxu0
    %v573 = vadd.f32 %v452, %v572
    %v574 = vpop.f32.mrb[0].mxu0
    %v575 = vadd.f32 %v452, %v574
    %v576 = vpop.f32.mrb[0].mxu0
    %v577 = vadd.f32 %v457, %v576
    %v578 = vpop.f32.mrb[0].mxu0
    %v579 = vadd.f32 %v457, %v578
    %580 = vmatprep.mubr.bf16.mxu0 0
    %581 = vmatmul.mubr.bf16.gmra.mrb[0].mxu0 %v483
    %v582 = vpop.f32.mrb[0].mxu0
    %v583 = vadd.f32 %v462, %v582
    %v584 = vpop.f32.mrb[0].mxu0
    %v585 = vadd.f32 %v462, %v584
    %v586 = vpop.f32.mrb[0].mxu0
    %v587 = vadd.f32 %v467, %v586
    %v588 = vpop.f32.mrb[0].mxu0
    %v589 = vadd.f32 %v467, %v588
    %590 = vdwg.mxu0
    %v591 = vmax.f32 %v520, 0.0
    %v592 = vmax.f32 %v522, 0.0
    %v593 = vmax.f32 %v573, 0.0
    %v594 = vmax.f32 %v575, 0.0
    %v595 = vmax.f32 %v524, 0.0
    %v596 = vmax.f32 %v526, 0.0
    %v597 = vmax.f32 %v577, 0.0
    %v598 = vmax.f32 %v579, 0.0
    %v599 = vmax.f32 %v530, 0.0
    %v600 = vmax.f32 %v532, 0.0
    %v601 = vmax.f32 %v583, 0.0
    %v602 = vmax.f32 %v585, 0.0
    %v603 = vmax.f32 %v534, 0.0
    %v604 = vmax.f32 %v536, 0.0
    %v605 = vmax.f32 %v587, 0.0
    %v606 = vmax.f32 %v589, 0.0
    %v607 = vpack.c.bf16 %v595, %v591
    %v608 = vpack.c.bf16 %v596, %v592
    %v609 = vpack.c.bf16 %v597, %v593
    %v610 = vpack.c.bf16 %v598, %v594
    %v611 = vpack.c.bf16 %v603, %v599
    %v612 = vpack.c.bf16 %v604, %v600
    %v613 = vpack.c.bf16 %v605, %v601
    %v614 = vpack.c.bf16 %v606, %v602
    %v615 = vld [vmem:[%s4] sm:$0x1]
    %v616 = vld [vmem:[#allocation2] sm:$0x1]
    %618 = vset.pattern.permute.xlu0 0
    %619 = vperm.xlu0 %618, %v616
    %v620 = vpop.permute.xlu0 %619
    %v622 = vlaneseq
    %v623 = vshrl.u32 %v622, 7
    %v624 = vsub.s32 0, %v623
    %v625 = vrot.slane %v620, %v624
    %v627 = vsel %vm127, %v615, 0
    %629 = vmatprep.subr.bf16.mxu0 %v608
    %630 = vmatpush1.bf16.msra.mxu0 %v607
    %631 = vmatprep.subr.bf16.mxu0 %v612
    %632 = vmatpush1.bf16.msra.mxu0 %v611
    %633 = vmatprep.subr.bf16.mxu0 0
    %634 = vmatpush1.bf16.msra.mxu0 0
    %635 = vmatprep.subr.bf16.mxu0 0
    %636 = vmatpush1.bf16.msra.mxu0 0
    %637 = vmatprep.subr.bf16.mxu0 0
    %638 = vmatpush1.bf16.msra.mxu0 0
    %639 = vmatprep.subr.bf16.mxu0 0
    %640 = vmatpush1.bf16.msra.mxu0 0
    %641 = vmatprep.subr.bf16.mxu0 0
    %642 = vmatpush1.bf16.msra.mxu0 0
    %643 = vmatprep.subr.bf16.mxu0 0
    %644 = vmatpush1.bf16.msra.mxu0 0
    %645 = vmatprep.subr.bf16.mxu0 0
    %646 = vmatpush1.bf16.msra.mxu0 0
    %647 = vmatprep.subr.bf16.mxu0 0
    %648 = vmatpush1.bf16.msra.mxu0 0
    %649 = vmatprep.subr.bf16.mxu0 0
    %650 = vmatpush1.bf16.msra.mxu0 0
    %651 = vmatprep.subr.bf16.mxu0 0
    %652 = vmatpush1.bf16.msra.mxu0 0
    %653 = vmatprep.subr.bf16.mxu0 0
    %654 = vmatpush1.bf16.msra.mxu0 0
    %655 = vmatprep.subr.bf16.mxu0 0
    %656 = vmatpush1.bf16.msra.mxu0 0
    %657 = vmatprep.subr.bf16.mxu0 0
    %658 = vmatpush1.bf16.msra.mxu0 0
    %659 = vmatprep.subr.bf16.mxu0 0
    %660 = vmatpush1.bf16.msra.mxu0 0
    %661 = vmatprep.mubr.bf16.mxu0 0
    %662 = vmatmul.mubr.bf16.gmra.mrb[0].mxu0 %v627
    %v663 = vpop.f32.mrb[0].mxu0
    %v664 = vadd.f32 %v625, %v663
    %v665 = vpop.f32.mrb[0].mxu0
    %v666 = vadd.f32 %v625, %v665
    %v667 = vpop.f32.mrb[0].mxu0
    %v668 = vpop.f32.mrb[0].mxu0
    %669 = vdwg.mxu0
    %670 = vmatprep.subr.bf16.mxu0 %v610
    %671 = vmatpush1.bf16.msra.mxu0 %v609
    %672 = vmatprep.subr.bf16.mxu0 %v614
    %673 = vmatpush1.bf16.msra.mxu0 %v613
    %674 = vmatprep.subr.bf16.mxu0 0
    %675 = vmatpush1.bf16.msra.mxu0 0
    %676 = vmatprep.subr.bf16.mxu0 0
    %677 = vmatpush1.bf16.msra.mxu0 0
    %678 = vmatprep.subr.bf16.mxu0 0
    %679 = vmatpush1.bf16.msra.mxu0 0
    %680 = vmatprep.subr.bf16.mxu0 0
    %681 = vmatpush1.bf16.msra.mxu0 0
    %682 = vmatprep.subr.bf16.mxu0 0
    %683 = vmatpush1.bf16.msra.mxu0 0
    %684 = vmatprep.subr.bf16.mxu0 0
    %685 = vmatpush1.bf16.msra.mxu0 0
    %686 = vmatprep.subr.bf16.mxu0 0
    %687 = vmatpush1.bf16.msra.mxu0 0
    %688 = vmatprep.subr.bf16.mxu0 0
    %689 = vmatpush1.bf16.msra.mxu0 0
    %690 = vmatprep.subr.bf16.mxu0 0
    %691 = vmatpush1.bf16.msra.mxu0 0
    %692 = vmatprep.subr.bf16.mxu0 0
    %693 = vmatpush1.bf16.msra.mxu0 0
    %694 = vmatprep.subr.bf16.mxu0 0
    %695 = vmatpush1.bf16.msra.mxu0 0
    %696 = vmatprep.subr.bf16.mxu0 0
    %697 = vmatpush1.bf16.msra.mxu0 0
    %698 = vmatprep.subr.bf16.mxu0 0
    %699 = vmatpush1.bf16.msra.mxu0 0
    %700 = vmatprep.subr.bf16.mxu0 0
    %701 = vmatpush1.bf16.msra.mxu0 0
    %702 = vmatprep.mubr.bf16.mxu0 0
    %703 = vmatmul.mubr.bf16.gmra.mrb[0].mxu0 %v627
    %v704 = vpop.f32.mrb[0].mxu0
    %v705 = vadd.f32 %v625, %v704
    %v706 = vpop.f32.mrb[0].mxu0
    %v707 = vadd.f32 %v625, %v706
    %v708 = vpop.f32.mrb[0].mxu0
    %v709 = vpop.f32.mrb[0].mxu0
    %710 = vdwg.mxu0
    %v715 = vcombine.low %v664, %v666
    %v716 = vcombine.low %v705, %v707
    %v718 = vunpack.c.l.s4 1966171168
    %v719 = vunpack.c.0.s8 %v718
    %v720 = vlaneseq
    %v721 = vshrl.u32 %v720, 7
    %v722 = vsub.s32 %v719, %v721
    %v723 = vrot.slane %v715, %v722
    %v725 = vunpack.c.l.s4 1966171168
    %v726 = vunpack.c.0.s8 %v725
    %v727 = vlaneseq
    %v728 = vshrl.u32 %v727, 7
    %v729 = vsub.s32 %v726, %v728
    %v730 = vrot.slane %v716, %v729
    %v731 = vcombine.low %v723, %v730
    %v733 = vunpack.c.l.s4 1966171168
    %v734 = vunpack.c.0.s8 %v733
    %v735 = vlaneseq
    %v736 = vshrl.u32 %v735, 7
    %v737 = vsub.s32 %v734, %v736
    %v738 = vrot.slane %v731, %v737
    %v740 = vlaneseq
    %vm741 = vcmp.ge.s32.totalorder %v740, 0
    %vm742 = vcmp.lt.s32.totalorder %v740, 512
    %vm743 = vmand %vm741, %vm742
    %744 = vst.msk [vmem:[#allocation6] sm:$0xf] %vm743, %v738
    // Predicated region
    $region30: #{tpu_custom_call.1} parent=1 // pred_check
      _
    $region31: #{tpu_custom_call.1} parent=1 // pred_check_branch
      %746 = sbr.rel (0) target = $region33
    $region32: #{tpu_custom_call.1} parent=1 // pred_region
      %s748 = ssub.s32 64, 64
      %749 = vsyncadd [#allocation5], %s748
      %s751 = sshll.u32 [#allocation6], 4
      %s752 = int_to_ptr.vmem [resolvable:$true] %s751
      %754 = dma.vmem_to_hbm [thread:$0]  %s752, 64, %s6, [#allocation5]
    $region33: #{tpu_custom_call.1} parent=1 // pred_fallthru
      _
    // Predicated region
    $region34: #{tpu_custom_call.1} parent=1 // pred_check
      _
    $region35: #{tpu_custom_call.1} parent=1 // pred_check_branch
      %756 = sbr.rel (0) target = $region37
    $region36: #{tpu_custom_call.1} parent=1 // pred_region
      %757 = dma.done [#allocation5], 64
    $region37: #{tpu_custom_call.1} parent=1 // pred_fallthru
      _
    %758 = vsyncpa [#allocation4], 1
    %759 = vsyncpa [#allocation5], 1

</llo_original>
